<compile_context>
chip_gen: v7x
topology: tpu7x:2x2x1
jax: 0.10.0
libtpu: 0.0.40
codegen_flags: <defaults>
</compile_context>

<pallas_src>
import jax
import jax.numpy as jnp
from jax.experimental import pallas as pl
from jax.experimental.pallas import tpu as pltpu

_NUM_MID = 2  # hidden3, hidden4 (the only un-fused (H,H) layers left)


def _round_up(x, m):
    return ((x + m - 1) // m) * m


def _mlp_kernel(x_ref,
                w_a_ref, b_a_ref,
                w_mid_ref, b_mid_ref,
                w_b_ref, b_b_ref,
                o_ref):
    # fused (inp -> hidden1 -> hidden2), then relu
    h = jnp.dot(x_ref[...], w_a_ref[...],
                preferred_element_type=jnp.float32) + b_a_ref[...]
    h = jnp.maximum(h, 0.0)

    # hidden3 + relu, hidden4 + relu (unrolled)
    for k in range(_NUM_MID):
        h = jnp.dot(h.astype(w_mid_ref.dtype), w_mid_ref[k],
                    preferred_element_type=jnp.float32) + b_mid_ref[k]
        h = jnp.maximum(h, 0.0)

    # fused (hidden5 -> out), no activation; compact (bt, n_out) store
    y = jnp.dot(h.astype(w_b_ref.dtype), w_b_ref[...],
                preferred_element_type=jnp.float32) + b_b_ref[...]
    o_ref[...] = y.astype(o_ref.dtype)


def pack_params(params, *, compute_dtype=jnp.float32):
    """One-time weight preparation (hoisted out of the per-call path).

    params: dict with 'w_in','b_in','w1'..'w5','b1'..'b5','w_out','b_out';
            weights stored (in, out) (transposed vs torch), biases (1, out).
    """
    hp = jax.lax.Precision.HIGHEST
    # inp -> hidden1 -> hidden2 have no nonlinearity between them: fuse.
    w_a = jnp.dot(jnp.dot(params["w_in"], params["w1"], precision=hp),
                  params["w2"], precision=hp)
    b_a = jnp.dot(jnp.dot(params["b_in"], params["w1"], precision=hp)
                  + params["b1"], params["w2"], precision=hp) + params["b2"]
    # hidden5 -> out have no nonlinearity between them: fuse.
    w_b = jnp.dot(params["w5"], params["w_out"], precision=hp)
    b_b = jnp.dot(params["b5"], params["w_out"], precision=hp) + params["b_out"]
    # remaining (H,H) layers packed into single arrays
    w_mid = jnp.stack([params["w3"], params["w4"]])
    b_mid = jnp.stack([params["b3"], params["b4"]])
    return {
        "w_a": w_a.astype(compute_dtype), "b_a": b_a.astype(jnp.float32),
        "w_mid": w_mid.astype(compute_dtype), "b_mid": b_mid.astype(jnp.float32),
        "w_b": w_b.astype(compute_dtype), "b_b": b_b.astype(jnp.float32),
    }


def net_forward(x, packed, *, batch_tile=None, out_dtype=jnp.float32):
    """Fused MLP forward as one Pallas kernel.

    x:      (B, N_input)
    packed: output of pack_params(params)
    """
    B, n_in = x.shape
    n_hid = packed["w_a"].shape[1]
    n_out = packed["w_b"].shape[1]
    compute_dtype = packed["w_a"].dtype

    # ---- batch tiling: whole batch if small; >=2 grid steps (v7x 2 TCs) and
    # ---- large tiles for big B; cdiv grid handles any B (no pad / slice). ---
    if batch_tile is not None:
        bt = _round_up(batch_tile, 8)
    elif B > 512:
        bt = min(2048, _round_up(pl.cdiv(B, 2), 8))
    else:
        bt = _round_up(B, 8)
    grid = (pl.cdiv(B, bt),)

    x_c = x.astype(compute_dtype)

    in_specs = [
        pl.BlockSpec((bt, n_in), lambda i: (i, 0)),                        # x
        pl.BlockSpec((n_in, n_hid), lambda i: (0, 0)),                     # W_A
        pl.BlockSpec((1, n_hid), lambda i: (0, 0)),                        # b_A
        pl.BlockSpec((_NUM_MID, n_hid, n_hid), lambda i: (0, 0, 0)),       # w_mid
        pl.BlockSpec((_NUM_MID, 1, n_hid), lambda i: (0, 0, 0)),           # b_mid
        pl.BlockSpec((n_hid, n_out), lambda i: (0, 0)),                    # W_B
        pl.BlockSpec((1, n_out), lambda i: (0, 0)),                        # b_B
    ]
    # Compact output: last dim equals the full array dim -> legal block shape;
    # the tiny (bt, n_out) store is masked but the HBM stream is 32x smaller.
    out_spec = pl.BlockSpec((bt, n_out), lambda i: (i, 0))

    operands = (x_c, packed["w_a"], packed["b_a"],
                packed["w_mid"], packed["b_mid"],
                packed["w_b"], packed["b_b"])

    flops = 2 * B * (n_in * n_hid + _NUM_MID * n_hid * n_hid + n_hid * n_out)
    bytes_accessed = (sum(int(a.size) * a.dtype.itemsize for a in operands)
                      + B * n_out * jnp.dtype(out_dtype).itemsize)
    cost = pl.CostEstimate(flops=flops, transcendentals=0,
                           bytes_accessed=bytes_accessed)

    return pl.pallas_call(
        _mlp_kernel,
        out_shape=jax.ShapeDtypeStruct((B, n_out), out_dtype),
        grid_spec=pltpu.PrefetchScalarGridSpec(
            num_scalar_prefetch=0,
            grid=grid,
            in_specs=in_specs,
            out_specs=out_spec,
        ),
        compiler_params=pltpu.CompilerParams(
            dimension_semantics=("parallel",),
        ),
        cost_estimate=cost,
    )(*operands)


def init_params(key, n_input, n_hidden, n_output):
    """PyTorch-Linear-style init: U(-1/sqrt(fan_in), 1/sqrt(fan_in))."""
    def linear(key, fan_in, fan_out):
        kw, kb = jax.random.split(key)
        bound = 1.0 / jnp.sqrt(jnp.float32(fan_in))
        w = jax.random.uniform(kw, (fan_in, fan_out), jnp.float32, -bound, bound)
        b = jax.random.uniform(kb, (1, fan_out), jnp.float32, -bound, bound)
        return w, b

    keys = jax.random.split(key, 7)
    params = {}
    params["w_in"], params["b_in"] = linear(keys[0], n_input, n_hidden)
    for i in range(1, 6):
        params[f"w{i}"], params[f"b{i}"] = linear(keys[i], n_hidden, n_hidden)
    params["w_out"], params["b_out"] = linear(keys[6], n_hidden, n_output)
    return params


def reference_forward(x, p):
    """Pure-JAX reference mirroring the PyTorch forward exactly (unfused)."""
    h = x @ p["w_in"] + p["b_in"]
    h = h @ p["w1"] + p["b1"]
    h = jnp.maximum(h @ p["w2"] + p["b2"], 0.0)
    h = jnp.maximum(h @ p["w3"] + p["b3"], 0.0)
    h = jnp.maximum(h @ p["w4"] + p["b4"], 0.0)
    h = h @ p["w5"] + p["b5"]
    return h @ p["w_out"] + p["b_out"]


if __name__ == "__main__":
    key = jax.random.PRNGKey(0)
    k_params, k_x = jax.random.split(key)

    # Net(N_input=16, N_hidden_layers=5, N_hidden_neur=32, N_output=4)
    N_input, N_hidden_neur, N_output = 16, 32, 4
    batch = 16

    params = init_params(k_params, N_input, N_hidden_neur, N_output)
    packed = pack_params(params)            # one-time weight prep (hoisted)
    x = jax.random.normal(k_x, (batch, N_input), jnp.float32)

    fwd = jax.jit(net_forward)              # per-call path = just the kernel
    y = jax.block_until_ready(fwd(x, packed))

    y_ref = reference_forward(x, params)
    assert y.shape == (batch, N_output)
    assert jnp.allclose(y, y_ref, atol=1e-3, rtol=1e-3), "mismatch vs reference"

    # also exercise the ragged / multi-step cdiv-grid path (B=20, tile=8 -> 3 steps)
    x2 = jax.random.normal(jax.random.PRNGKey(1), (20, N_input), jnp.float32)
    y2 = jax.block_until_ready(net_forward(x2, packed, batch_tile=8))
    assert y2.shape == (20, N_output)
    assert jnp.allclose(y2, reference_forward(x2, params), atol=1e-3, rtol=1e-3)

    print("KERNEL_OK")
</pallas_src>

<mosaic_0001>
module attributes {stable_mosaic.version = 11 : i64} {
  func.func @_mlp_kernel(%arg0: i32, %arg1: memref<16x16xf32, #tpu.memory_space<vmem>>, %arg2: memref<16x32xf32, #tpu.memory_space<vmem>>, %arg3: memref<1x32xf32, #tpu.memory_space<vmem>>, %arg4: memref<2x32x32xf32, #tpu.memory_space<vmem>>, %arg5: memref<2x1x32xf32, #tpu.memory_space<vmem>>, %arg6: memref<32x4xf32, #tpu.memory_space<vmem>>, %arg7: memref<1x4xf32, #tpu.memory_space<vmem>>, %arg8: memref<16x4xf32, #tpu.memory_space<vmem>>) attributes {dimension_semantics = [#tpu.dimension_semantics<parallel>], iteration_bounds = array<i64: 1>, scalar_prefetch = 0 : i64, scratch_operands = 0 : i64, tpu.core_type = #tpu.core_type<tc>, window_params = [{transform_indices = @transform_0, window_bounds = array<i64: 16, 16>}, {pipeline_mode = #tpu.pipeline_mode<synchronous>, transform_indices = @transform_1, window_bounds = array<i64: 16, 32>}, {pipeline_mode = #tpu.pipeline_mode<synchronous>, transform_indices = @transform_2, window_bounds = array<i64: 1, 32>}, {pipeline_mode = #tpu.pipeline_mode<synchronous>, transform_indices = @transform_3, window_bounds = array<i64: 2, 32, 32>}, {pipeline_mode = #tpu.pipeline_mode<synchronous>, transform_indices = @transform_4, window_bounds = array<i64: 2, 1, 32>}, {pipeline_mode = #tpu.pipeline_mode<synchronous>, transform_indices = @transform_5, window_bounds = array<i64: 32, 4>}, {pipeline_mode = #tpu.pipeline_mode<synchronous>, transform_indices = @transform_6, window_bounds = array<i64: 1, 4>}, {transform_indices = @transform_7, window_bounds = array<i64: 16, 4>}]} {
    %c0 = arith.constant 0 : index
    %c0_0 = arith.constant 0 : index
    %0 = vector.load %arg1[%c0, %c0_0] : memref<16x16xf32, #tpu.memory_space<vmem>>, vector<16x16xf32>
    %c0_1 = arith.constant 0 : index
    %c0_2 = arith.constant 0 : index
    %1 = vector.load %arg2[%c0_1, %c0_2] : memref<16x32xf32, #tpu.memory_space<vmem>>, vector<16x32xf32>
    %cst = arith.constant dense<0.000000e+00> : vector<16x32xf32>
    %2 = tpu.matmul %0, %1, %cst {dimension_numbers = #tpu.dot_dimension_numbers<[1], [0], [0], [1], [0, 0, 1, 1], [], []>} : vector<16x16xf32>, vector<16x32xf32>, vector<16x32xf32> -> vector<16x32xf32>
    %c0_3 = arith.constant 0 : index
    %c0_4 = arith.constant 0 : index
    %3 = vector.load %arg3[%c0_3, %c0_4] : memref<1x32xf32, #tpu.memory_space<vmem>>, vector<1x32xf32>
    %4 = vector.broadcast %3 : vector<1x32xf32> to vector<16x32xf32>
    %5 = arith.addf %2, %4 : vector<16x32xf32>
    %cst_5 = arith.constant 0.000000e+00 : f32
    %6 = vector.broadcast %cst_5 : f32 to vector<16x32xf32>
    %7 = arith.maximumf %5, %6 : vector<16x32xf32>
    %c0_6 = arith.constant 0 : index
    %c0_7 = arith.constant 0 : index
    %c0_8 = arith.constant 0 : index
    %8 = vector.load %arg4[%c0_6, %c0_7, %c0_8] : memref<2x32x32xf32, #tpu.memory_space<vmem>>, vector<1x32x32xf32>
    %9 = vector.shape_cast %8 : vector<1x32x32xf32> to vector<32x32xf32>
    %cst_9 = arith.constant dense<0.000000e+00> : vector<16x32xf32>
    %10 = tpu.matmul %7, %9, %cst_9 {dimension_numbers = #tpu.dot_dimension_numbers<[1], [0], [0], [1], [0, 0, 1, 1], [], []>} : vector<16x32xf32>, vector<32x32xf32>, vector<16x32xf32> -> vector<16x32xf32>
    %c0_10 = arith.constant 0 : index
    %c0_11 = arith.constant 0 : index
    %c0_12 = arith.constant 0 : index
    %11 = vector.load %arg5[%c0_10, %c0_11, %c0_12] : memref<2x1x32xf32, #tpu.memory_space<vmem>>, vector<1x1x32xf32>
    %12 = vector.shape_cast %11 : vector<1x1x32xf32> to vector<1x32xf32>
    %13 = vector.broadcast %12 : vector<1x32xf32> to vector<16x32xf32>
    %14 = arith.addf %10, %13 : vector<16x32xf32>
    %cst_13 = arith.constant 0.000000e+00 : f32
    %15 = vector.broadcast %cst_13 : f32 to vector<16x32xf32>
    %16 = arith.maximumf %14, %15 : vector<16x32xf32>
    %c1 = arith.constant 1 : index
    %c0_14 = arith.constant 0 : index
    %c0_15 = arith.constant 0 : index
    %17 = vector.load %arg4[%c1, %c0_14, %c0_15] : memref<2x32x32xf32, #tpu.memory_space<vmem>>, vector<1x32x32xf32>
    %18 = vector.shape_cast %17 : vector<1x32x32xf32> to vector<32x32xf32>
    %cst_16 = arith.constant dense<0.000000e+00> : vector<16x32xf32>
    %19 = tpu.matmul %16, %18, %cst_16 {dimension_numbers = #tpu.dot_dimension_numbers<[1], [0], [0], [1], [0, 0, 1, 1], [], []>} : vector<16x32xf32>, vector<32x32xf32>, vector<16x32xf32> -> vector<16x32xf32>
    %c1_17 = arith.constant 1 : index
    %c0_18 = arith.constant 0 : index
    %c0_19 = arith.constant 0 : index
    %20 = vector.load %arg5[%c1_17, %c0_18, %c0_19] : memref<2x1x32xf32, #tpu.memory_space<vmem>>, vector<1x1x32xf32>
    %21 = vector.shape_cast %20 : vector<1x1x32xf32> to vector<1x32xf32>
    %22 = vector.broadcast %21 : vector<1x32xf32> to vector<16x32xf32>
    %23 = arith.addf %19, %22 : vector<16x32xf32>
    %cst_20 = arith.constant 0.000000e+00 : f32
    %24 = vector.broadcast %cst_20 : f32 to vector<16x32xf32>
    %25 = arith.maximumf %23, %24 : vector<16x32xf32>
    %c0_21 = arith.constant 0 : index
    %c0_22 = arith.constant 0 : index
    %26 = vector.load %arg6[%c0_21, %c0_22] : memref<32x4xf32, #tpu.memory_space<vmem>>, vector<32x4xf32>
    %cst_23 = arith.constant dense<0.000000e+00> : vector<16x4xf32>
    %27 = tpu.matmul %25, %26, %cst_23 {dimension_numbers = #tpu.dot_dimension_numbers<[1], [0], [0], [1], [0, 0, 1, 1], [], []>} : vector<16x32xf32>, vector<32x4xf32>, vector<16x4xf32> -> vector<16x4xf32>
    %c0_24 = arith.constant 0 : index
    %c0_25 = arith.constant 0 : index
    %28 = vector.load %arg7[%c0_24, %c0_25] : memref<1x4xf32, #tpu.memory_space<vmem>>, vector<1x4xf32>
    %29 = vector.broadcast %28 : vector<1x4xf32> to vector<16x4xf32>
    %30 = arith.addf %27, %29 : vector<16x4xf32>
    %c0_26 = arith.constant 0 : index
    %c0_27 = arith.constant 0 : index
    %31 = vector.load %arg8[%c0_26, %c0_27] : memref<16x4xf32, #tpu.memory_space<vmem>>, vector<16x4xf32>
    tpu.vector_store %arg8[%c0_26, %c0_27], %30 {strides = array<i32>} : memref<16x4xf32, #tpu.memory_space<vmem>>, vector<16x4xf32>,
    return
  }
  func.func @transform_0(%arg0: i32) -> (i32, i32) {
    %c0_i32 = arith.constant 0 : i32
    %c0_i32_0 = arith.constant 0 : i32
    return %arg0, %c0_i32 : i32, i32
  }
  func.func @transform_1(%arg0: i32) -> (i32, i32) {
    %c0_i32 = arith.constant 0 : i32
    %c0_i32_0 = arith.constant 0 : i32
    %c0_i32_1 = arith.constant 0 : i32
    return %c0_i32, %c0_i32_0 : i32, i32
  }
  func.func @transform_2(%arg0: i32) -> (i32, i32) {
    %c0_i32 = arith.constant 0 : i32
    %c0_i32_0 = arith.constant 0 : i32
    %c0_i32_1 = arith.constant 0 : i32
    return %c0_i32, %c0_i32_0 : i32, i32
  }
  func.func @transform_3(%arg0: i32) -> (i32, i32, i32) {
    %c0_i32 = arith.constant 0 : i32
    %c0_i32_0 = arith.constant 0 : i32
    %c0_i32_1 = arith.constant 0 : i32
    %c0_i32_2 = arith.constant 0 : i32
    return %c0_i32, %c0_i32_0, %c0_i32_1 : i32, i32, i32
  }
  func.func @transform_4(%arg0: i32) -> (i32, i32, i32) {
    %c0_i32 = arith.constant 0 : i32
    %c0_i32_0 = arith.constant 0 : i32
    %c0_i32_1 = arith.constant 0 : i32
    %c0_i32_2 = arith.constant 0 : i32
    return %c0_i32, %c0_i32_0, %c0_i32_1 : i32, i32, i32
  }
  func.func @transform_5(%arg0: i32) -> (i32, i32) {
    %c0_i32 = arith.constant 0 : i32
    %c0_i32_0 = arith.constant 0 : i32
    %c0_i32_1 = arith.constant 0 : i32
    return %c0_i32, %c0_i32_0 : i32, i32
  }
  func.func @transform_6(%arg0: i32) -> (i32, i32) {
    %c0_i32 = arith.constant 0 : i32
    %c0_i32_0 = arith.constant 0 : i32
    %c0_i32_1 = arith.constant 0 : i32
    return %c0_i32, %c0_i32_0 : i32, i32
  }
  func.func @transform_7(%arg0: i32) -> (i32, i32) {
    %c0_i32 = arith.constant 0 : i32
    %c0_i32_0 = arith.constant 0 : i32
    return %arg0, %c0_i32 : i32, i32
  }
}

</mosaic_0001>

<llo_original>
// kernel: net_forward.1
$region0: #{net_forward.1}
  #allocation0 [shape = 'u32[]', space=smem, size = 0x4, offset = 0x4, fixed_abs, tag = 'smem constant byte address 0x4 - core index']
  #allocation1 [shape = 'u32[144,128]{1,0:T(1,128)}', space=vmem, size = 0x12000, scoped, tag = 'internal scratch']
  %s0 = inlined_call_operand.vmem [shape: f32[16,16], index: 0, kind: input, shape index: {}]
  %s1 = inlined_call_operand.vmem [shape: f32[16,32], index: 1, kind: input, shape index: {}]
  %s2 = inlined_call_operand.vmem [shape: f32[1,32], index: 2, kind: input, shape index: {}]
  %s3 = inlined_call_operand.hbm [shape: f32[2,32,32], index: 3, kind: input, shape index: {}]
  %s4 = inlined_call_operand.vmem [shape: f32[2,1,32], index: 4, kind: input, shape index: {}]
  %s5 = inlined_call_operand.vmem [shape: f32[32,4], index: 5, kind: input, shape index: {}]
  %s6 = inlined_call_operand.vmem [shape: f32[1,4], index: 6, kind: input, shape index: {}]
  %s7 = inlined_call_operand.vmem [shape: f32[16,4], index: 7, kind: output, shape index: {}]
  %s8 = sld [smem:[#allocation0]]
  $region42: #{net_forward.1} parent=0
    _
  %s10 = ssub.s32 1, %s8
  %s11 = scalar_select 0, %s10, %s8
  $region1: #{net_forward.1} parent=0
    #allocation2 [shape = 'u8[32768]{0}', space=vmem, size = 0x8000, scoped, tag = 'input window, operand 3, single buffered']
    #allocation3 [shape = 's32[1]{0}', space=sflag, size = 0x4, scoped, tag = 'scoped memory for net_forward.1']
    %12 = vsyncpa [#allocation3], 0
    // Predicated region
    $region2: #{net_forward.1} parent=1 // pred_check
      _
    $region3: #{net_forward.1} parent=1 // pred_check_branch
      %14 = sbr.rel (0) target = $region5
    $region4: #{net_forward.1} parent=1 // pred_region
      _
    $region5: #{net_forward.1} parent=1 // pred_fallthru
      _
    // Predicated region
    $region6: #{net_forward.1} parent=1 // pred_check
      _
    $region7: #{net_forward.1} parent=1 // pred_check_branch
      %16 = sbr.rel (0) target = $region9
    $region8: #{net_forward.1} parent=1 // pred_region
      _
    $region9: #{net_forward.1} parent=1 // pred_fallthru
      _
    // Predicated region
    $region10: #{net_forward.1} parent=1 // pred_check
      _
    $region11: #{net_forward.1} parent=1 // pred_check_branch
      %18 = sbr.rel (0) target = $region13
    $region12: #{net_forward.1} parent=1 // pred_region
      _
    $region13: #{net_forward.1} parent=1 // pred_fallthru
      _
    // Predicated region
    $region14: #{net_forward.1} parent=1 // pred_check
      _
    $region15: #{net_forward.1} parent=1 // pred_check_branch
      %20 = sbr.rel (0) target = $region17
    $region16: #{net_forward.1} parent=1 // pred_region
      %s22 = ssub.s32 1024, 1024
      %23 = vsyncadd [#allocation3], %s22
      %s24 = sshll.u32 [#allocation2], 4
      %s25 = int_to_ptr.vmem [resolvable:$true] %s24
      %30 = dma.hbm_to_vmem [thread:$0]  %s3, 1024, %s25, [#allocation3], 128, 128, 8
    $region17: #{net_forward.1} parent=1 // pred_fallthru
      _
    // Predicated region
    $region18: #{net_forward.1} parent=1 // pred_check
      _
    $region19: #{net_forward.1} parent=1 // pred_check_branch
      %32 = sbr.rel (0) target = $region21
    $region20: #{net_forward.1} parent=1 // pred_region
      _
    $region21: #{net_forward.1} parent=1 // pred_fallthru
      _
    // Predicated region
    $region22: #{net_forward.1} parent=1 // pred_check
      _
    $region23: #{net_forward.1} parent=1 // pred_check_branch
      %34 = sbr.rel (0) target = $region25
    $region24: #{net_forward.1} parent=1 // pred_region
      _
    $region25: #{net_forward.1} parent=1 // pred_fallthru
      _
    // Predicated region
    $region26: #{net_forward.1} parent=1 // pred_check
      _
    $region27: #{net_forward.1} parent=1 // pred_check_branch
      %36 = sbr.rel (0) target = $region29
    $region28: #{net_forward.1} parent=1 // pred_region
      _
    $region29: #{net_forward.1} parent=1 // pred_fallthru
      _
    // Predicated region
    $region30: #{net_forward.1} parent=1 // pred_check
      _
    $region31: #{net_forward.1} parent=1 // pred_check_branch
      %38 = sbr.rel (0) target = $region33
    $region32: #{net_forward.1} parent=1 // pred_region
      %39 = dma.done [#allocation3], 1024
    $region33: #{net_forward.1} parent=1 // pred_fallthru
      _
    %v40 = vld [vmem:[%s0] sm:$0xff]
    %v41 = vld [vmem:[%s0 + $0x8] sm:$0xff]
    %v42 = vld [vmem:[%s1] sm:$0xff]
    %v43 = vld [vmem:[%s1 + $0x8] sm:$0xff]
    %v44 = vld [vmem:[%s2] sm:$0x1]
    %v46 = vlaneseq
    %v47 = vshrl.u32 %v46, 7
    %v48 = vsub.s32 0, %v47
    %v49 = vrot.slane %v44, %v48
    %vm51 = vcmask 130048
    %v53 = vsel %vm51, %v40, 0
    %v56 = vsel %vm51, %v41, 0
    %58 = vmatprep.subr.mxu0 0.0
    %59 = vmatpush1.msra.mxu0 %v42
    %60 = vmatprep.subr.mxu0 0.0
    %61 = vmatpush1.msra.mxu0 %v43
    %62 = vmatprep.subr.mxu0 0.0
    %63 = vmatpush1.msra.mxu0 0.0
    %64 = vmatprep.subr.mxu0 0.0
    %65 = vmatpush1.msra.mxu0 0.0
    %66 = vmatprep.subr.mxu0 0.0
    %67 = vmatpush1.msra.mxu0 0.0
    %68 = vmatprep.subr.mxu0 0.0
    %69 = vmatpush1.msra.mxu0 0.0
    %70 = vmatprep.subr.mxu0 0.0
    %71 = vmatpush1.msra.mxu0 0.0
    %72 = vmatprep.subr.mxu0 0.0
    %73 = vmatpush1.msra.mxu0 0.0
    %74 = vmatprep.subr.mxu0 0.0
    %75 = vmatpush1.msra.mxu0 0.0
    %76 = vmatprep.subr.mxu0 0.0
    %77 = vmatpush1.msra.mxu0 0.0
    %78 = vmatprep.subr.mxu0 0.0
    %79 = vmatpush1.msra.mxu0 0.0
    %80 = vmatprep.subr.mxu0 0.0
    %81 = vmatpush1.msra.mxu0 0.0
    %82 = vmatprep.subr.mxu0 0.0
    %83 = vmatpush1.msra.mxu0 0.0
    %84 = vmatprep.subr.mxu0 0.0
    %85 = vmatpush1.msra.mxu0 0.0
    %86 = vmatprep.subr.mxu0 0.0
    %87 = vmatpush1.msra.mxu0 0.0
    %88 = vmatprep.subr.mxu0 0.0
    %89 = vmatpush1.msra.mxu0 0.0
    %90 = vmatprep.subr.mxu0 0.0
    %91 = vmatpush1.msra.mxu0 0.0
    %92 = vmatprep.subr.mxu0 0.0
    %93 = vmatpush1.msra.mxu0 0.0
    %94 = vmatprep.subr.mxu0 0.0
    %95 = vmatpush1.msra.mxu0 0.0
    %96 = vmatprep.subr.mxu0 0.0
    %97 = vmatpush1.msra.mxu0 0.0
    %98 = vmatprep.subr.mxu0 0.0
    %99 = vmatpush1.msra.mxu0 0.0
    %100 = vmatprep.subr.mxu0 0.0
    %101 = vmatpush1.msra.mxu0 0.0
    %102 = vmatprep.subr.mxu0 0.0
    %103 = vmatpush1.msra.mxu0 0.0
    %104 = vmatprep.subr.mxu0 0.0
    %105 = vmatpush1.msra.mxu0 0.0
    %106 = vmatprep.subr.mxu0 0.0
    %107 = vmatpush1.msra.mxu0 0.0
    %108 = vmatprep.subr.mxu0 0.0
    %109 = vmatpush1.msra.mxu0 0.0
    %110 = vmatprep.subr.mxu0 0.0
    %111 = vmatpush1.msra.mxu0 0.0
    %112 = vmatprep.subr.mxu0 0.0
    %113 = vmatpush1.msra.mxu0 0.0
    %114 = vmatprep.subr.mxu0 0.0
    %115 = vmatpush1.msra.mxu0 0.0
    %116 = vmatprep.subr.mxu0 0.0
    %117 = vmatpush1.msra.mxu0 0.0
    %118 = vmatprep.subr.mxu0 0.0
    %119 = vmatpush1.msra.mxu0 0.0
    %120 = vmatprep.subr.mxu0 0.0
    %121 = vmatpush1.msra.mxu0 0.0
    %122 = vmatprep.mubr.f32.mxu0 0.0
    %123 = vmatmul.mubr.f32.gmra.mrb[0].mxu0 %v53
    %v124 = vpop.f32.mrb[0].mxu0
    %v125 = vadd.f32 %v49, %v124
    %v126 = vpop.f32.mrb[0].mxu0
    %127 = vmatprep.mubr.f32.mxu0 0.0
    %128 = vmatmul.mubr.f32.gmra.mrb[0].mxu0 %v56
    %v129 = vpop.f32.mrb[0].mxu0
    %v130 = vadd.f32 %v49, %v129
    %v131 = vpop.f32.mrb[0].mxu0
    %132 = vdwg.mxu0
    %v133 = vmax.f32 %v125, 0.0
    %v134 = vmax.f32 %v130, 0.0
    %v135 = vld [vmem:[#allocation2] sm:$0xff]
    %v136 = vld [vmem:[#allocation2 + $0x8] sm:$0xff]
    %v137 = vld [vmem:[#allocation2 + $0x10] sm:$0xff]
    %v138 = vld [vmem:[#allocation2 + $0x18] sm:$0xff]
    %v139 = vld [vmem:[%s4] sm:$0x1]
    %v141 = vlaneseq
    %v142 = vshrl.u32 %v141, 7
    %v143 = vsub.s32 0, %v142
    %v144 = vrot.slane %v139, %v143
    %vm146 = vcmask 261120
    %v148 = vsel %vm146, %v133, 0
    %v151 = vsel %vm146, %v134, 0
    %153 = vmatprep.subr.mxu0 0.0
    %154 = vmatpush1.msra.mxu0 %v135
    %155 = vmatprep.subr.mxu0 0.0
    %156 = vmatpush1.msra.mxu0 %v136
    %157 = vmatprep.subr.mxu0 0.0
    %158 = vmatpush1.msra.mxu0 %v137
    %159 = vmatprep.subr.mxu0 0.0
    %160 = vmatpush1.msra.mxu0 %v138
    %161 = vmatprep.subr.mxu0 0.0
    %162 = vmatpush1.msra.mxu0 0.0
    %163 = vmatprep.subr.mxu0 0.0
    %164 = vmatpush1.msra.mxu0 0.0
    %165 = vmatprep.subr.mxu0 0.0
    %166 = vmatpush1.msra.mxu0 0.0
    %167 = vmatprep.subr.mxu0 0.0
    %168 = vmatpush1.msra.mxu0 0.0
    %169 = vmatprep.subr.mxu0 0.0
    %170 = vmatpush1.msra.mxu0 0.0
    %171 = vmatprep.subr.mxu0 0.0
    %172 = vmatpush1.msra.mxu0 0.0
    %173 = vmatprep.subr.mxu0 0.0
    %174 = vmatpush1.msra.mxu0 0.0
    %175 = vmatprep.subr.mxu0 0.0
    %176 = vmatpush1.msra.mxu0 0.0
    %177 = vmatprep.subr.mxu0 0.0
    %178 = vmatpush1.msra.mxu0 0.0
    %179 = vmatprep.subr.mxu0 0.0
    %180 = vmatpush1.msra.mxu0 0.0
    %181 = vmatprep.subr.mxu0 0.0
    %182 = vmatpush1.msra.mxu0 0.0
    %183 = vmatprep.subr.mxu0 0.0
    %184 = vmatpush1.msra.mxu0 0.0
    %185 = vmatprep.subr.mxu0 0.0
    %186 = vmatpush1.msra.mxu0 0.0
    %187 = vmatprep.subr.mxu0 0.0
    %188 = vmatpush1.msra.mxu0 0.0
    %189 = vmatprep.subr.mxu0 0.0
    %190 = vmatpush1.msra.mxu0 0.0
    %191 = vmatprep.subr.mxu0 0.0
    %192 = vmatpush1.msra.mxu0 0.0
    %193 = vmatprep.subr.mxu0 0.0
    %194 = vmatpush1.msra.mxu0 0.0
    %195 = vmatprep.subr.mxu0 0.0
    %196 = vmatpush1.msra.mxu0 0.0
    %197 = vmatprep.subr.mxu0 0.0
    %198 = vmatpush1.msra.mxu0 0.0
    %199 = vmatprep.subr.mxu0 0.0
    %200 = vmatpush1.msra.mxu0 0.0
    %201 = vmatprep.subr.mxu0 0.0
    %202 = vmatpush1.msra.mxu0 0.0
    %203 = vmatprep.subr.mxu0 0.0
    %204 = vmatpush1.msra.mxu0 0.0
    %205 = vmatprep.subr.mxu0 0.0
    %206 = vmatpush1.msra.mxu0 0.0
    %207 = vmatprep.subr.mxu0 0.0
    %208 = vmatpush1.msra.mxu0 0.0
    %209 = vmatprep.subr.mxu0 0.0
    %210 = vmatpush1.msra.mxu0 0.0
    %211 = vmatprep.subr.mxu0 0.0
    %212 = vmatpush1.msra.mxu0 0.0
    %213 = vmatprep.subr.mxu0 0.0
    %214 = vmatpush1.msra.mxu0 0.0
    %215 = vmatprep.subr.mxu0 0.0
    %216 = vmatpush1.msra.mxu0 0.0
    %217 = vmatprep.mubr.f32.mxu0 0.0
    %218 = vmatmul.mubr.f32.gmra.mrb[0].mxu0 %v148
    %v219 = vpop.f32.mrb[0].mxu0
    %v220 = vadd.f32 %v144, %v219
    %v221 = vpop.f32.mrb[0].mxu0
    %222 = vmatprep.mubr.f32.mxu0 0.0
    %223 = vmatmul.mubr.f32.gmra.mrb[0].mxu0 %v151
    %v224 = vpop.f32.mrb[0].mxu0
    %v225 = vadd.f32 %v144, %v224
    %v226 = vpop.f32.mrb[0].mxu0
    %227 = vdwg.mxu0
    %v228 = vmax.f32 %v220, 0.0
    %v229 = vmax.f32 %v225, 0.0
    %s230 = scalar_lea.vmem [#allocation2], 32
    %v231 = vld [vmem:[%s230] sm:$0xff]
    %v232 = vld [vmem:[%s230 + $0x8] sm:$0xff]
    %v233 = vld [vmem:[%s230 + $0x10] sm:$0xff]
    %v234 = vld [vmem:[%s230 + $0x18] sm:$0xff]
    %s235 = scalar_lea.vmem %s4, 1
    %v236 = vld [vmem:[%s235] sm:$0x1]
    %v238 = vlaneseq
    %v239 = vshrl.u32 %v238, 7
    %v240 = vsub.s32 0, %v239
    %v241 = vrot.slane %v236, %v240
    %v244 = vsel %vm146, %v228, 0
    %v247 = vsel %vm146, %v229, 0
    %249 = vmatprep.subr.mxu0 0.0
    %250 = vmatpush1.msra.mxu0 %v231
    %251 = vmatprep.subr.mxu0 0.0
    %252 = vmatpush1.msra.mxu0 %v232
    %253 = vmatprep.subr.mxu0 0.0
    %254 = vmatpush1.msra.mxu0 %v233
    %255 = vmatprep.subr.mxu0 0.0
    %256 = vmatpush1.msra.mxu0 %v234
    %257 = vmatprep.subr.mxu0 0.0
    %258 = vmatpush1.msra.mxu0 0.0
    %259 = vmatprep.subr.mxu0 0.0
    %260 = vmatpush1.msra.mxu0 0.0
    %261 = vmatprep.subr.mxu0 0.0
    %262 = vmatpush1.msra.mxu0 0.0
    %263 = vmatprep.subr.mxu0 0.0
    %264 = vmatpush1.msra.mxu0 0.0
    %265 = vmatprep.subr.mxu0 0.0
    %266 = vmatpush1.msra.mxu0 0.0
    %267 = vmatprep.subr.mxu0 0.0
    %268 = vmatpush1.msra.mxu0 0.0
    %269 = vmatprep.subr.mxu0 0.0
    %270 = vmatpush1.msra.mxu0 0.0
    %271 = vmatprep.subr.mxu0 0.0
    %272 = vmatpush1.msra.mxu0 0.0
    %273 = vmatprep.subr.mxu0 0.0
    %274 = vmatpush1.msra.mxu0 0.0
    %275 = vmatprep.subr.mxu0 0.0
    %276 = vmatpush1.msra.mxu0 0.0
    %277 = vmatprep.subr.mxu0 0.0
    %278 = vmatpush1.msra.mxu0 0.0
    %279 = vmatprep.subr.mxu0 0.0
    %280 = vmatpush1.msra.mxu0 0.0
    %281 = vmatprep.subr.mxu0 0.0
    %282 = vmatpush1.msra.mxu0 0.0
    %283 = vmatprep.subr.mxu0 0.0
    %284 = vmatpush1.msra.mxu0 0.0
    %285 = vmatprep.subr.mxu0 0.0
    %286 = vmatpush1.msra.mxu0 0.0
    %287 = vmatprep.subr.mxu0 0.0
    %288 = vmatpush1.msra.mxu0 0.0
    %289 = vmatprep.subr.mxu0 0.0
    %290 = vmatpush1.msra.mxu0 0.0
    %291 = vmatprep.subr.mxu0 0.0
    %292 = vmatpush1.msra.mxu0 0.0
    %293 = vmatprep.subr.mxu0 0.0
    %294 = vmatpush1.msra.mxu0 0.0
    %295 = vmatprep.subr.mxu0 0.0
    %296 = vmatpush1.msra.mxu0 0.0
    %297 = vmatprep.subr.mxu0 0.0
    %298 = vmatpush1.msra.mxu0 0.0
    %299 = vmatprep.subr.mxu0 0.0
    %300 = vmatpush1.msra.mxu0 0.0
    %301 = vmatprep.subr.mxu0 0.0
    %302 = vmatpush1.msra.mxu0 0.0
    %303 = vmatprep.subr.mxu0 0.0
    %304 = vmatpush1.msra.mxu0 0.0
    %305 = vmatprep.subr.mxu0 0.0
    %306 = vmatpush1.msra.mxu0 0.0
    %307 = vmatprep.subr.mxu0 0.0
    %308 = vmatpush1.msra.mxu0 0.0
    %309 = vmatprep.subr.mxu0 0.0
    %310 = vmatpush1.msra.mxu0 0.0
    %311 = vmatprep.subr.mxu0 0.0
    %312 = vmatpush1.msra.mxu0 0.0
    %313 = vmatprep.mubr.f32.mxu0 0.0
    %314 = vmatmul.mubr.f32.gmra.mrb[0].mxu0 %v244
    %v315 = vpop.f32.mrb[0].mxu0
    %v316 = vadd.f32 %v241, %v315
    %v317 = vpop.f32.mrb[0].mxu0
    %318 = vmatprep.mubr.f32.mxu0 0.0
    %319 = vmatmul.mubr.f32.gmra.mrb[0].mxu0 %v247
    %v320 = vpop.f32.mrb[0].mxu0
    %v321 = vadd.f32 %v241, %v320
    %v322 = vpop.f32.mrb[0].mxu0
    %323 = vdwg.mxu0
    %v324 = vmax.f32 %v316, 0.0
    %v325 = vmax.f32 %v321, 0.0
    %v326 = vld [vmem:[%s5] sm:$0xff]
    %v327 = vld [vmem:[%s5 + $0x8] sm:$0xff]
    %v328 = vld [vmem:[%s5 + $0x10] sm:$0xff]
    %v329 = vld [vmem:[%s5 + $0x18] sm:$0xff]
    %v330 = vld [vmem:[%s6] sm:$0x1]
    %v332 = vlaneseq
    %v333 = vshrl.u32 %v332, 7
    %v334 = vsub.s32 0, %v333
    %v335 = vrot.slane %v330, %v334
    %v338 = vsel %vm146, %v324, 0
    %v341 = vsel %vm146, %v325, 0
    %343 = vmatprep.subr.mxu0 0.0
    %344 = vmatpush1.msra.mxu0 %v326
    %345 = vmatprep.subr.mxu0 0.0
    %346 = vmatpush1.msra.mxu0 %v327
    %347 = vmatprep.subr.mxu0 0.0
    %348 = vmatpush1.msra.mxu0 %v328
    %349 = vmatprep.subr.mxu0 0.0
    %350 = vmatpush1.msra.mxu0 %v329
    %351 = vmatprep.subr.mxu0 0.0
    %352 = vmatpush1.msra.mxu0 0.0
    %353 = vmatprep.subr.mxu0 0.0
    %354 = vmatpush1.msra.mxu0 0.0
    %355 = vmatprep.subr.mxu0 0.0
    %356 = vmatpush1.msra.mxu0 0.0
    %357 = vmatprep.subr.mxu0 0.0
    %358 = vmatpush1.msra.mxu0 0.0
    %359 = vmatprep.subr.mxu0 0.0
    %360 = vmatpush1.msra.mxu0 0.0
    %361 = vmatprep.subr.mxu0 0.0
    %362 = vmatpush1.msra.mxu0 0.0
    %363 = vmatprep.subr.mxu0 0.0
    %364 = vmatpush1.msra.mxu0 0.0
    %365 = vmatprep.subr.mxu0 0.0
    %366 = vmatpush1.msra.mxu0 0.0
    %367 = vmatprep.subr.mxu0 0.0
    %368 = vmatpush1.msra.mxu0 0.0
    %369 = vmatprep.subr.mxu0 0.0
    %370 = vmatpush1.msra.mxu0 0.0
    %371 = vmatprep.subr.mxu0 0.0
    %372 = vmatpush1.msra.mxu0 0.0
    %373 = vmatprep.subr.mxu0 0.0
    %374 = vmatpush1.msra.mxu0 0.0
    %375 = vmatprep.subr.mxu0 0.0
    %376 = vmatpush1.msra.mxu0 0.0
    %377 = vmatprep.subr.mxu0 0.0
    %378 = vmatpush1.msra.mxu0 0.0
    %379 = vmatprep.subr.mxu0 0.0
    %380 = vmatpush1.msra.mxu0 0.0
    %381 = vmatprep.subr.mxu0 0.0
    %382 = vmatpush1.msra.mxu0 0.0
    %383 = vmatprep.subr.mxu0 0.0
    %384 = vmatpush1.msra.mxu0 0.0
    %385 = vmatprep.subr.mxu0 0.0
    %386 = vmatpush1.msra.mxu0 0.0
    %387 = vmatprep.subr.mxu0 0.0
    %388 = vmatpush1.msra.mxu0 0.0
    %389 = vmatprep.subr.mxu0 0.0
    %390 = vmatpush1.msra.mxu0 0.0
    %391 = vmatprep.subr.mxu0 0.0
    %392 = vmatpush1.msra.mxu0 0.0
    %393 = vmatprep.subr.mxu0 0.0
    %394 = vmatpush1.msra.mxu0 0.0
    %395 = vmatprep.subr.mxu0 0.0
    %396 = vmatpush1.msra.mxu0 0.0
    %397 = vmatprep.subr.mxu0 0.0
    %398 = vmatpush1.msra.mxu0 0.0
    %399 = vmatprep.subr.mxu0 0.0
    %400 = vmatpush1.msra.mxu0 0.0
    %401 = vmatprep.subr.mxu0 0.0
    %402 = vmatpush1.msra.mxu0 0.0
    %403 = vmatprep.subr.mxu0 0.0
    %404 = vmatpush1.msra.mxu0 0.0
    %405 = vmatprep.subr.mxu0 0.0
    %406 = vmatpush1.msra.mxu0 0.0
    %407 = vmatprep.mubr.f32.mxu0 0.0
    %408 = vmatmul.mubr.f32.gmra.mrb[0].mxu0 %v338
    %v409 = vpop.f32.mrb[0].mxu0
    %v410 = vadd.f32 %v335, %v409
    %v411 = vpop.f32.mrb[0].mxu0
    %412 = vmatprep.mubr.f32.mxu0 0.0
    %413 = vmatmul.mubr.f32.gmra.mrb[0].mxu0 %v341
    %v414 = vpop.f32.mrb[0].mxu0
    %v415 = vadd.f32 %v335, %v414
    %v416 = vpop.f32.mrb[0].mxu0
    %417 = vdwg.mxu0
    %vm418 = vcmask 31744
    %419 = vst.msk [vmem:[%s7] sm:$0xff] %vm418, %v410
    %420 = vst.msk [vmem:[%s7 + $0x8] sm:$0xff] %vm418, %v415
    // Predicated region
    $region34: #{net_forward.1} parent=1 // pred_check
      _
    $region35: #{net_forward.1} parent=1 // pred_check_branch
      %422 = sbr.rel (0) target = $region37
    $region36: #{net_forward.1} parent=1 // pred_region
      _
    $region37: #{net_forward.1} parent=1 // pred_fallthru
      _
    // Predicated region
    $region38: #{net_forward.1} parent=1 // pred_check
      _
    $region39: #{net_forward.1} parent=1 // pred_check_branch
      %424 = sbr.rel (0) target = $region41
    $region40: #{net_forward.1} parent=1 // pred_region
      _
    $region41: #{net_forward.1} parent=1 // pred_fallthru
      _
    %425 = vsyncpa [#allocation3], 1

</llo_original>
